<compile_context>
chip_gen: v7x
topology: tpu7x:2x2x1
jax: 0.10.0
libtpu: 0.0.40
codegen_flags: <defaults>
</compile_context>

<pallas_src>
import math

import jax
import jax.numpy as jnp
import numpy as np
from jax import lax
from jax.experimental import pallas as pl
from jax.experimental.pallas import tpu as pltpu

_LANE = 128                      # TPU lane width
_HIGH = jax.lax.Precision.HIGHEST   # only used by the pure-JAX reference
_MIB = 1024 * 1024


def _round_up(x, m):
  return (x + m - 1) // m * m


# ----------------------------------------------------------------------------
# Kernel
# ----------------------------------------------------------------------------
def _make_kernel(tm, rows_per_elem, P, c_pad, mid, res_ch, L, l_pad):
  """One grid step processes `tm` rows; each 128-lane row packs P consecutive
  sequence positions x c_pad channels of a single batch element."""

  def kernel(x_ref, w1_ref, b1_ref, w2t_ref, w2p_ref, w2n_ref, b2_ref,
             w3_ref, b3_ref, out_ref, res2_ref):
    x = x_ref[...]                                          # (tm, 128) bf16

    lane = lax.broadcasted_iota(jnp.int32, (tm, _LANE), 1)
    row_in_elem = lax.broadcasted_iota(jnp.int32, (tm, _LANE), 0) % rows_per_elem

    # --- conv1 (k=1) + folded BN1 + ReLU (dropout = identity in eval) -------
    # residual_1 lanes pass through W1 via identity columns and skip the ReLU.
    h = jnp.dot(x, w1_ref[...], preferred_element_type=jnp.float32) + b1_ref[...]
    if res_ch > 0:
      h = jnp.where(lane % c_pad < mid, jnp.maximum(h, 0.0), h)
    else:
      h = jnp.maximum(h, 0.0)

    # Zero length-padding positions so the k=3 taps see PyTorch's zero pad and
    # padding never leaks into valid outputs.
    if l_pad != L:
      seq = row_in_elem * P + lane // c_pad
      h = jnp.where(seq < L, h, 0.0)

    # --- conv2 (k=3, padding=1) on concat([h1, residual_1], channels) -------
    # Block-tridiagonal weight: in-row +/-1 taps in one MXU push.
    t = jnp.dot(h.astype(jnp.bfloat16), w2t_ref[...],
                preferred_element_type=jnp.float32)
    if rows_per_elem > 1:
      # Cross-row taps: sublane rolls (XLU) + corner matmuls, masked at
      # batch-element boundaries (tiles are aligned to whole elements).
      prev_rows = pltpu.roll(h, shift=1, axis=0).astype(jnp.bfloat16)
      next_rows = pltpu.roll(h, shift=tm - 1, axis=0).astype(jnp.bfloat16)
      t_prev = jnp.dot(prev_rows, w2p_ref[...], preferred_element_type=jnp.float32)
      t_next = jnp.dot(next_rows, w2n_ref[...], preferred_element_type=jnp.float32)
      t = t + jnp.where(row_in_elem > 0, t_prev, 0.0)
      t = t + jnp.where(row_in_elem < rows_per_elem - 1, t_next, 0.0)

    h2 = jnp.maximum(t + b2_ref[...], 0.0)
    res2_ref[...] = h2.astype(res2_ref.dtype)               # residual_2 (bf16)

    # --- conv3 (k=1) + folded BN3 + ReLU + skip connection -------------------
    h3 = jnp.dot(h2.astype(jnp.bfloat16), w3_ref[...],
                 preferred_element_type=jnp.float32)
    h3 = jnp.maximum(h3 + b3_ref[...], 0.0)
    out_ref[...] = (h3 + x.astype(jnp.float32)).astype(out_ref.dtype)

  return kernel


# ----------------------------------------------------------------------------
# Generation-aware tiling
# ----------------------------------------------------------------------------
def _hw_config():
  """VMEM / grid-splitting budgets per TPU generation."""
  kind = ""
  try:
    kind = jax.devices()[0].device_kind.lower()
  except Exception:
    pass
  vmem_cap = None
  try:
    vmem_cap = int(pltpu.get_tpu_info().vmem_capacity_bytes)
  except Exception:
    vmem_cap = None
  is_v7 = ("v7" in kind) or (vmem_cap is not None and vmem_cap <= 64 * _MIB)
  if is_v7:
    # v7x: 64 MiB physical VMEM per core, 2 TensorCores -> smaller budget and
    # prefer >=4 grid steps (>=2 per core) so input DMAs overlap with compute.
    return {"desired_steps": 4, "vmem_limit": 48 * _MIB, "tile_budget": 36 * _MIB}
  # v5e / v6e: single TensorCore, 128 MiB physical VMEM -> one big tile/step.
  return {"desired_steps": 1, "vmem_limit": 64 * _MIB, "tile_budget": 48 * _MIB}


def _choose_tiling(N, rows_per_elem, desired_steps, tile_budget_bytes, target_rows):
  # tm must be a multiple of rows_per_elem (whole batch elements per tile) and
  # of 16 (bf16 sublane packing).
  m_align = 16 // math.gcd(rows_per_elem, 16)
  # Per-row VMEM: double-buffered bf16 input + 2 bf16 outputs + ~8 live f32 temps.
  bytes_per_row = 2 * 256 + 2 * 2 * 256 + 8 * 512
  rows_cap = max(m_align * rows_per_elem, tile_budget_bytes // bytes_per_row)
  rows_goal = max(rows_per_elem, min(target_rows, rows_cap))
  b_tile = max(1, min(N, rows_goal // rows_per_elem))
  if desired_steps > 1 and N > 1:
    b_tile = min(b_tile, max(1, -(-N // desired_steps)))
  b_tile = _round_up(b_tile, m_align)
  grid = -(-N // b_tile)
  return b_tile, grid, grid * b_tile


# ----------------------------------------------------------------------------
# Parameters (synthetic, matching the PyTorch module's shapes)
# ----------------------------------------------------------------------------
def init_params(key, in_ch, mid_ch, out_ch, res_ch=0):
  ks = jax.random.split(key, 18)
  p = {}
  p["w1"] = 0.2 * jax.random.normal(ks[0], (mid_ch, in_ch, 1), jnp.float32)
  p["b1c"] = 0.1 * jax.random.normal(ks[1], (mid_ch,), jnp.float32)
  p["w2"] = 0.2 * jax.random.normal(ks[2], (mid_ch, mid_ch + res_ch, 3),
                                    jnp.float32)
  p["b2c"] = 0.1 * jax.random.normal(ks[3], (mid_ch,), jnp.float32)
  p["w3"] = 0.2 * jax.random.normal(ks[4], (out_ch, mid_ch, 1), jnp.float32)
  p["b3c"] = 0.1 * jax.random.normal(ks[5], (out_ch,), jnp.float32)
  for i, (c, base) in enumerate([(mid_ch, 6), (mid_ch, 10), (out_ch, 14)],
                                start=1):
    p[f"bn{i}_gamma"] = 1.0 + 0.1 * jax.random.normal(ks[base], (c,), jnp.float32)
    p[f"bn{i}_beta"] = 0.1 * jax.random.normal(ks[base + 1], (c,), jnp.float32)
    p[f"bn{i}_mean"] = 0.1 * jax.random.normal(ks[base + 2], (c,), jnp.float32)
    p[f"bn{i}_var"] = 0.5 + jnp.abs(jax.random.normal(ks[base + 3], (c,),
                                                      jnp.float32))
  return p


# ----------------------------------------------------------------------------
# Forward wrapper
# ----------------------------------------------------------------------------
def bottleneck_forward(x_ncl, params, residual_1_ncl=None, eps=1e-5,
                       target_rows=2048):
  """Runs Bottleneck.forward (eval mode). Inputs/outputs are PyTorch (N, C, L)."""
  x = jnp.transpose(x_ncl, (0, 2, 1)).astype(jnp.float32)      # (N, L, Cin)
  has_res = residual_1_ncl is not None
  r1 = (jnp.transpose(residual_1_ncl, (0, 2, 1)).astype(jnp.float32)
        if has_res else None)

  N, L, in_ch = x.shape
  mid = params["w1"].shape[0]
  out_ch = params["w3"].shape[0]
  res_ch = r1.shape[-1] if has_res else 0
  assert out_ch == in_ch, "skip connection requires out_channels == in_channels"

  # Channel packing: c_pad lanes per position, P positions per 128-lane row.
  needed = max(in_ch + res_ch, mid + res_ch, out_ch)
  assert needed <= _LANE, "channel count exceeds the 128-lane group"
  c_pad = max(1, int(pl.next_power_of_2(needed)))
  P = _LANE // c_pad

  # --- fold BN (eval, running stats) into conv weights / biases -------------
  def fold(i, conv_b):
    g, b = params[f"bn{i}_gamma"], params[f"bn{i}_beta"]
    m, v = params[f"bn{i}_mean"], params[f"bn{i}_var"]
    s = g / jnp.sqrt(v + eps)
    return s, (conv_b - m) * s + b

  s1, b1f = fold(1, params["b1c"])
  s2, b2f = fold(2, params["b2c"])
  s3, b3f = fold(3, params["b3c"])

  # conv1 block (cin -> cout) plus identity passthrough for residual_1 lanes.
  B1 = jnp.zeros((c_pad, c_pad), jnp.float32)
  B1 = B1.at[:in_ch, :mid].set(jnp.transpose(params["w1"][:, :, 0]) * s1[None, :])
  if res_ch:
    B1 = B1.at[in_ch:in_ch + res_ch, mid:mid + res_ch].set(jnp.eye(res_ch))

  # conv2 taps -> block-tridiagonal (in-row +/-1 taps) + cross-row corners.
  def tap(k):
    A = jnp.zeros((c_pad, c_pad), jnp.float32)
    return A.at[:mid + res_ch, :mid].set(
        jnp.transpose(params["w2"][:, :, k]) * s2[None, :])

  A0, A1, A2 = tap(0), tap(1), tap(2)
  eyeP = jnp.eye(P, dtype=jnp.float32)
  W2t = (jnp.kron(eyeP, A1)
         + jnp.kron(jnp.eye(P, k=1, dtype=jnp.float32), A0)
         + jnp.kron(jnp.eye(P, k=-1, dtype=jnp.float32), A2))
  Ecp = jnp.zeros((P, P), jnp.float32).at[P - 1, 0].set(1.0)
  Ecn = jnp.zeros((P, P), jnp.float32).at[0, P - 1].set(1.0)
  W2p = jnp.kron(Ecp, A0)
  W2n = jnp.kron(Ecn, A2)

  B3 = jnp.zeros((c_pad, c_pad), jnp.float32)
  B3 = B3.at[:mid, :out_ch].set(jnp.transpose(params["w3"][:, :, 0]) * s3[None, :])

  W1 = jnp.kron(eyeP, B1).astype(jnp.bfloat16)
  W2t = W2t.astype(jnp.bfloat16)
  W2p = W2p.astype(jnp.bfloat16)
  W2n = W2n.astype(jnp.bfloat16)
  W3 = jnp.kron(eyeP, B3).astype(jnp.bfloat16)

  def slot_bias(b, n):
    v = jnp.zeros((c_pad,), jnp.float32).at[:n].set(b)
    return jnp.tile(v, P).reshape(1, _LANE)

  b1p, b2p, b3p = slot_bias(b1f, mid), slot_bias(b2f, mid), slot_bias(b3f, out_ch)

  # --- activation layout & tiling --------------------------------------------
  rows_per_elem = -(-L // P)
  l_pad = rows_per_elem * P
  hw = _hw_config()
  b_tile, grid, n_pad = _choose_tiling(N, rows_per_elem, hw["desired_steps"],
                                       hw["tile_budget"], target_rows)
  tm = b_tile * rows_per_elem
  assert tm % rows_per_elem == 0 and tm % 16 == 0

  a = x if not has_res else jnp.concatenate([x, r1], axis=-1)
  a = jnp.pad(a, ((0, n_pad - N), (0, l_pad - L), (0, c_pad - a.shape[-1])))
  x_rows = a.reshape(n_pad * rows_per_elem, _LANE).astype(jnp.bfloat16)

  row_spec = pl.BlockSpec((tm, _LANE), lambda i: (i, 0))

  def full_spec(arr):
    return pl.BlockSpec(arr.shape, lambda i: (0, 0))

  n_rows = n_pad * rows_per_elem
  out_shapes = (jax.ShapeDtypeStruct((n_rows, _LANE), jnp.bfloat16),
                jax.ShapeDtypeStruct((n_rows, _LANE), jnp.bfloat16))

  out_rows, res2_rows = pl.pallas_call(
      _make_kernel(tm, rows_per_elem, P, c_pad, mid, res_ch, L, l_pad),
      out_shape=out_shapes,
      grid_spec=pltpu.PrefetchScalarGridSpec(
          num_scalar_prefetch=0,
          grid=(grid,),
          in_specs=[row_spec, full_spec(W1), full_spec(b1p), full_spec(W2t),
                    full_spec(W2p), full_spec(W2n), full_spec(b2p),
                    full_spec(W3), full_spec(b3p)],
          out_specs=[row_spec, row_spec]),
      compiler_params=pltpu.CompilerParams(
          dimension_semantics=("parallel",),
          vmem_limit_bytes=hw["vmem_limit"]),
  )(x_rows, W1, b1p, W2t, W2p, W2n, b2p, W3, b3p)

  out = out_rows.reshape(n_pad, l_pad, c_pad)[:N, :L, :out_ch].astype(jnp.float32)
  res2 = res2_rows.reshape(n_pad, l_pad, c_pad)[:N, :L, :mid].astype(jnp.float32)
  # back to PyTorch NCL
  return jnp.transpose(out, (0, 2, 1)), jnp.transpose(res2, (0, 2, 1))


# ----------------------------------------------------------------------------
# Pure-JAX reference (NCL, f32) mirroring the PyTorch forward in eval mode
# ----------------------------------------------------------------------------
def reference_ncl(x, params, residual_1=None, eps=1e-5):
  def bn(y, i):
    g = params[f"bn{i}_gamma"][None, :, None]
    b = params[f"bn{i}_beta"][None, :, None]
    m = params[f"bn{i}_mean"][None, :, None]
    v = params[f"bn{i}_var"][None, :, None]
    return (y - m) / jnp.sqrt(v + eps) * g + b

  L = x.shape[2]
  h = jnp.einsum("ncl,oc->nol", x, params["w1"][:, :, 0], precision=_HIGH)
  h = h + params["b1c"][None, :, None]
  h = jax.nn.relu(bn(h, 1))
  if residual_1 is not None:
    h = jnp.concatenate([h, residual_1], axis=1)
  hp = jnp.pad(h, ((0, 0), (0, 0), (1, 1)))
  h2 = sum(jnp.einsum("ncl,oc->nol", hp[:, :, k:k + L], params["w2"][:, :, k],
                      precision=_HIGH) for k in range(3))
  h2 = h2 + params["b2c"][None, :, None]
  h2 = jax.nn.relu(bn(h2, 2))
  res2 = h2
  h3 = jnp.einsum("ncl,oc->nol", h2, params["w3"][:, :, 0], precision=_HIGH)
  h3 = h3 + params["b3c"][None, :, None]
  h3 = jax.nn.relu(bn(h3, 3))
  return h3 + x, res2


if __name__ == "__main__":
  key = jax.random.PRNGKey(0)
  k_x, k_r, k_p1, k_p2 = jax.random.split(key, 4)

  N, L = 2, 16
  in_ch, mid_ch, out_ch, res_ch = 4, 8, 4, 4   # out_ch == in_ch (skip connection)

  x = jax.random.normal(k_x, (N, in_ch, L), jnp.float32)        # PyTorch NCL
  residual_1 = jax.random.normal(k_r, (N, res_ch, L), jnp.float32)

  # --- case 1: with residual_1 (residual_channels=4) ---
  params_res = init_params(k_p1, in_ch, mid_ch, out_ch, res_ch)
  out, res2 = bottleneck_forward(x, params_res, residual_1)
  out, res2 = jax.block_until_ready(out), jax.block_until_ready(res2)
  ref_out, ref_res2 = reference_ncl(x, params_res, residual_1)
  np.testing.assert_allclose(np.asarray(out), np.asarray(ref_out),
                             rtol=5e-2, atol=5e-2)
  np.testing.assert_allclose(np.asarray(res2), np.asarray(ref_res2),
                             rtol=5e-2, atol=5e-2)

  # --- case 2: no residual_1 (residual_channels=0) ---
  params_plain = init_params(k_p2, in_ch, mid_ch, out_ch, 0)
  out2, res2b = bottleneck_forward(x, params_plain, None)
  out2, res2b = jax.block_until_ready(out2), jax.block_until_ready(res2b)
  ref_out2, ref_res2b = reference_ncl(x, params_plain, None)
  np.testing.assert_allclose(np.asarray(out2), np.asarray(ref_out2),
                             rtol=5e-2, atol=5e-2)
  np.testing.assert_allclose(np.asarray(res2b), np.asarray(ref_res2b),
                             rtol=5e-2, atol=5e-2)

  print("KERNEL_OK")
</pallas_src>

<mosaic_0001>
module attributes {stable_mosaic.version = 11 : i64} {
  func.func @kernel(%arg0: i32, %arg1: memref<16x128xbf16, #tpu.memory_space<vmem>>, %arg2: memref<128x128xbf16, #tpu.memory_space<vmem>>, %arg3: memref<1x128xf32, #tpu.memory_space<vmem>>, %arg4: memref<128x128xbf16, #tpu.memory_space<vmem>>, %arg5: memref<128x128xbf16, #tpu.memory_space<vmem>>, %arg6: memref<128x128xbf16, #tpu.memory_space<vmem>>, %arg7: memref<1x128xf32, #tpu.memory_space<vmem>>, %arg8: memref<128x128xbf16, #tpu.memory_space<vmem>>, %arg9: memref<1x128xf32, #tpu.memory_space<vmem>>, %arg10: memref<16x128xbf16, #tpu.memory_space<vmem>>, %arg11: memref<16x128xbf16, #tpu.memory_space<vmem>>) attributes {dimension_semantics = [#tpu.dimension_semantics<parallel>], iteration_bounds = array<i64: 1>, scalar_prefetch = 0 : i64, scratch_operands = 0 : i64, tpu.core_type = #tpu.core_type<tc>, window_params = [{transform_indices = @transform_0, window_bounds = array<i64: 16, 128>}, {pipeline_mode = #tpu.pipeline_mode<synchronous>, transform_indices = @transform_1, window_bounds = array<i64: 128, 128>}, {pipeline_mode = #tpu.pipeline_mode<synchronous>, transform_indices = @transform_2, window_bounds = array<i64: 1, 128>}, {pipeline_mode = #tpu.pipeline_mode<synchronous>, transform_indices = @transform_3, window_bounds = array<i64: 128, 128>}, {pipeline_mode = #tpu.pipeline_mode<synchronous>, transform_indices = @transform_4, window_bounds = array<i64: 128, 128>}, {pipeline_mode = #tpu.pipeline_mode<synchronous>, transform_indices = @transform_5, window_bounds = array<i64: 128, 128>}, {pipeline_mode = #tpu.pipeline_mode<synchronous>, transform_indices = @transform_6, window_bounds = array<i64: 1, 128>}, {pipeline_mode = #tpu.pipeline_mode<synchronous>, transform_indices = @transform_7, window_bounds = array<i64: 128, 128>}, {pipeline_mode = #tpu.pipeline_mode<synchronous>, transform_indices = @transform_8, window_bounds = array<i64: 1, 128>}, {transform_indices = @transform_9, window_bounds = array<i64: 16, 128>}, {transform_indices = @transform_10, window_bounds = array<i64: 16, 128>}]} {
    %c0 = arith.constant 0 : index
    %c0_0 = arith.constant 0 : index
    %0 = vector.load %arg1[%c0, %c0_0] : memref<16x128xbf16, #tpu.memory_space<vmem>>, vector<16x128xbf16>
    %1 = tpu.iota {dimensions = array<i32: 1>} : vector<16x128xi32>
    %2 = tpu.iota {dimensions = array<i32: 0>} : vector<16x128xi32>
    %c2_i32 = arith.constant 2 : i32
    %c0_i32 = arith.constant 0 : i32
    %3 = arith.cmpi eq, %c2_i32, %c0_i32 : i32
    %c1_i32 = arith.constant 1 : i32
    %4 = arith.select %3, %c1_i32, %c2_i32 : i32
    %5 = vector.broadcast %4 : i32 to vector<16x128xi32>
    %6 = arith.remsi %2, %5 : vector<16x128xi32>
    %c0_i32_1 = arith.constant 0 : i32
    %7 = vector.broadcast %c0_i32_1 : i32 to vector<16x128xi32>
    %8 = arith.cmpi ne, %6, %7 : vector<16x128xi32>
    %c0_i32_2 = arith.constant 0 : i32
    %9 = vector.broadcast %c0_i32_2 : i32 to vector<16x128xi32>
    %10 = arith.cmpi slt, %6, %9 : vector<16x128xi32>
    %c0_i32_3 = arith.constant 0 : i32
    %11 = arith.cmpi slt, %4, %c0_i32_3 : i32
    %12 = vector.broadcast %11 : i1 to vector<16x128xi1>
    %13 = vector.broadcast %12 : vector<16x128xi1> to vector<16x128xi1>
    %14 = arith.xori %10, %13 : vector<16x128xi1>
    %15 = arith.andi %14, %8 : vector<16x128xi1>
    %16 = vector.broadcast %4 : i32 to vector<16x128xi32>
    %17 = arith.addi %6, %16 : vector<16x128xi32>
    %18 = arith.select %15, %17, %6 : vector<16x128xi1>, vector<16x128xi32>
    %c0_4 = arith.constant 0 : index
    %c0_5 = arith.constant 0 : index
    %19 = vector.load %arg2[%c0_4, %c0_5] : memref<128x128xbf16, #tpu.memory_space<vmem>>, vector<128x128xbf16>
    %cst = arith.constant dense<0.000000e+00> : vector<16x128xf32>
    %20 = tpu.matmul %0, %19, %cst {dimension_numbers = #tpu.dot_dimension_numbers<[1], [0], [0], [1], [0, 0, 1, 1], [], []>} : vector<16x128xbf16>, vector<128x128xbf16>, vector<16x128xf32> -> vector<16x128xf32>
    %c0_6 = arith.constant 0 : index
    %c0_7 = arith.constant 0 : index
    %21 = vector.load %arg3[%c0_6, %c0_7] : memref<1x128xf32, #tpu.memory_space<vmem>>, vector<1x128xf32>
    %22 = vector.broadcast %21 : vector<1x128xf32> to vector<16x128xf32>
    %23 = arith.addf %20, %22 : vector<16x128xf32>
    %c16_i32 = arith.constant 16 : i32
    %c0_i32_8 = arith.constant 0 : i32
    %24 = arith.cmpi eq, %c16_i32, %c0_i32_8 : i32
    %c1_i32_9 = arith.constant 1 : i32
    %25 = arith.select %24, %c1_i32_9, %c16_i32 : i32
    %26 = vector.broadcast %25 : i32 to vector<16x128xi32>
    %27 = arith.remsi %1, %26 : vector<16x128xi32>
    %c0_i32_10 = arith.constant 0 : i32
    %28 = vector.broadcast %c0_i32_10 : i32 to vector<16x128xi32>
    %29 = arith.cmpi ne, %27, %28 : vector<16x128xi32>
    %c0_i32_11 = arith.constant 0 : i32
    %30 = vector.broadcast %c0_i32_11 : i32 to vector<16x128xi32>
    %31 = arith.cmpi slt, %27, %30 : vector<16x128xi32>
    %c0_i32_12 = arith.constant 0 : i32
    %32 = arith.cmpi slt, %25, %c0_i32_12 : i32
    %33 = vector.broadcast %32 : i1 to vector<16x128xi1>
    %34 = vector.broadcast %33 : vector<16x128xi1> to vector<16x128xi1>
    %35 = arith.xori %31, %34 : vector<16x128xi1>
    %36 = arith.andi %35, %29 : vector<16x128xi1>
    %37 = vector.broadcast %25 : i32 to vector<16x128xi32>
    %38 = arith.addi %27, %37 : vector<16x128xi32>
    %39 = arith.select %36, %38, %27 : vector<16x128xi1>, vector<16x128xi32>
    %c8_i32 = arith.constant 8 : i32
    %40 = vector.broadcast %c8_i32 : i32 to vector<16x128xi32>
    %41 = arith.cmpi slt, %39, %40 : vector<16x128xi32>
    %cst_13 = arith.constant 0.000000e+00 : f32
    %42 = vector.broadcast %cst_13 : f32 to vector<16x128xf32>
    %43 = arith.maximumf %23, %42 : vector<16x128xf32>
    %44 = arith.select %41, %43, %23 : vector<16x128xi1>, vector<16x128xf32>
    %45 = arith.truncf %44 : vector<16x128xf32> to vector<16x128xbf16>
    %c0_14 = arith.constant 0 : index
    %c0_15 = arith.constant 0 : index
    %46 = vector.load %arg4[%c0_14, %c0_15] : memref<128x128xbf16, #tpu.memory_space<vmem>>, vector<128x128xbf16>
    %cst_16 = arith.constant dense<0.000000e+00> : vector<16x128xf32>
    %47 = tpu.matmul %45, %46, %cst_16 {dimension_numbers = #tpu.dot_dimension_numbers<[1], [0], [0], [1], [0, 0, 1, 1], [], []>} : vector<16x128xbf16>, vector<128x128xbf16>, vector<16x128xf32> -> vector<16x128xf32>
    %c1_i32_17 = arith.constant 1 : i32
    %48 = tpu.dynamic_rotate %44 by %c1_i32_17 dim 0 : vector<16x128xf32>, i32 -> vector<16x128xf32>
    %49 = arith.truncf %48 : vector<16x128xf32> to vector<16x128xbf16>
    %c15_i32 = arith.constant 15 : i32
    %50 = tpu.dynamic_rotate %44 by %c15_i32 dim 0 : vector<16x128xf32>, i32 -> vector<16x128xf32>
    %51 = arith.truncf %50 : vector<16x128xf32> to vector<16x128xbf16>
    %c0_18 = arith.constant 0 : index
    %c0_19 = arith.constant 0 : index
    %52 = vector.load %arg5[%c0_18, %c0_19] : memref<128x128xbf16, #tpu.memory_space<vmem>>, vector<128x128xbf16>
    %cst_20 = arith.constant dense<0.000000e+00> : vector<16x128xf32>
    %53 = tpu.matmul %49, %52, %cst_20 {dimension_numbers = #tpu.dot_dimension_numbers<[1], [0], [0], [1], [0, 0, 1, 1], [], []>} : vector<16x128xbf16>, vector<128x128xbf16>, vector<16x128xf32> -> vector<16x128xf32>
    %c0_21 = arith.constant 0 : index
    %c0_22 = arith.constant 0 : index
    %54 = vector.load %arg6[%c0_21, %c0_22] : memref<128x128xbf16, #tpu.memory_space<vmem>>, vector<128x128xbf16>
    %cst_23 = arith.constant dense<0.000000e+00> : vector<16x128xf32>
    %55 = tpu.matmul %51, %54, %cst_23 {dimension_numbers = #tpu.dot_dimension_numbers<[1], [0], [0], [1], [0, 0, 1, 1], [], []>} : vector<16x128xbf16>, vector<128x128xbf16>, vector<16x128xf32> -> vector<16x128xf32>
    %c0_i32_24 = arith.constant 0 : i32
    %56 = vector.broadcast %c0_i32_24 : i32 to vector<16x128xi32>
    %57 = arith.cmpi sgt, %18, %56 : vector<16x128xi32>
    %cst_25 = arith.constant 0.000000e+00 : f32
    %58 = vector.broadcast %cst_25 : f32 to vector<16x128xf32>
    %59 = arith.select %57, %53, %58 : vector<16x128xi1>, vector<16x128xf32>
    %60 = arith.addf %47, %59 : vector<16x128xf32>
    %c1_i32_26 = arith.constant 1 : i32
    %61 = vector.broadcast %c1_i32_26 : i32 to vector<16x128xi32>
    %62 = arith.cmpi slt, %18, %61 : vector<16x128xi32>
    %cst_27 = arith.constant 0.000000e+00 : f32
    %63 = vector.broadcast %cst_27 : f32 to vector<16x128xf32>
    %64 = arith.select %62, %55, %63 : vector<16x128xi1>, vector<16x128xf32>
    %65 = arith.addf %60, %64 : vector<16x128xf32>
    %c0_28 = arith.constant 0 : index
    %c0_29 = arith.constant 0 : index
    %66 = vector.load %arg7[%c0_28, %c0_29] : memref<1x128xf32, #tpu.memory_space<vmem>>, vector<1x128xf32>
    %67 = vector.broadcast %66 : vector<1x128xf32> to vector<16x128xf32>
    %68 = arith.addf %65, %67 : vector<16x128xf32>
    %cst_30 = arith.constant 0.000000e+00 : f32
    %69 = vector.broadcast %cst_30 : f32 to vector<16x128xf32>
    %70 = arith.maximumf %68, %69 : vector<16x128xf32>
    %71 = arith.truncf %70 : vector<16x128xf32> to vector<16x128xbf16>
    %c0_31 = arith.constant 0 : index
    %c0_32 = arith.constant 0 : index
    %72 = vector.load %arg11[%c0_31, %c0_32] : memref<16x128xbf16, #tpu.memory_space<vmem>>, vector<16x128xbf16>
    tpu.vector_store %arg11[%c0_31, %c0_32], %71 {strides = array<i32>} : memref<16x128xbf16, #tpu.memory_space<vmem>>, vector<16x128xbf16>,
    %73 = arith.truncf %70 : vector<16x128xf32> to vector<16x128xbf16>
    %c0_33 = arith.constant 0 : index
    %c0_34 = arith.constant 0 : index
    %74 = vector.load %arg8[%c0_33, %c0_34] : memref<128x128xbf16, #tpu.memory_space<vmem>>, vector<128x128xbf16>
    %cst_35 = arith.constant dense<0.000000e+00> : vector<16x128xf32>
    %75 = tpu.matmul %73, %74, %cst_35 {dimension_numbers = #tpu.dot_dimension_numbers<[1], [0], [0], [1], [0, 0, 1, 1], [], []>} : vector<16x128xbf16>, vector<128x128xbf16>, vector<16x128xf32> -> vector<16x128xf32>
    %c0_36 = arith.constant 0 : index
    %c0_37 = arith.constant 0 : index
    %76 = vector.load %arg9[%c0_36, %c0_37] : memref<1x128xf32, #tpu.memory_space<vmem>>, vector<1x128xf32>
    %77 = vector.broadcast %76 : vector<1x128xf32> to vector<16x128xf32>
    %78 = arith.addf %75, %77 : vector<16x128xf32>
    %cst_38 = arith.constant 0.000000e+00 : f32
    %79 = vector.broadcast %cst_38 : f32 to vector<16x128xf32>
    %80 = arith.maximumf %78, %79 : vector<16x128xf32>
    %81 = arith.extf %0 : vector<16x128xbf16> to vector<16x128xf32>
    %82 = arith.addf %80, %81 : vector<16x128xf32>
    %83 = arith.truncf %82 : vector<16x128xf32> to vector<16x128xbf16>
    %c0_39 = arith.constant 0 : index
    %c0_40 = arith.constant 0 : index
    %84 = vector.load %arg10[%c0_39, %c0_40] : memref<16x128xbf16, #tpu.memory_space<vmem>>, vector<16x128xbf16>
    tpu.vector_store %arg10[%c0_39, %c0_40], %83 {strides = array<i32>} : memref<16x128xbf16, #tpu.memory_space<vmem>>, vector<16x128xbf16>,
    return
  }
  func.func @transform_0(%arg0: i32) -> (i32, i32) {
    %c0_i32 = arith.constant 0 : i32
    %c0_i32_0 = arith.constant 0 : i32
    return %arg0, %c0_i32 : i32, i32
  }
  func.func @transform_1(%arg0: i32) -> (i32, i32) {
    %c0_i32 = arith.constant 0 : i32
    %c0_i32_0 = arith.constant 0 : i32
    %c0_i32_1 = arith.constant 0 : i32
    return %c0_i32, %c0_i32_0 : i32, i32
  }
  func.func @transform_2(%arg0: i32) -> (i32, i32) {
    %c0_i32 = arith.constant 0 : i32
    %c0_i32_0 = arith.constant 0 : i32
    %c0_i32_1 = arith.constant 0 : i32
    return %c0_i32, %c0_i32_0 : i32, i32
  }
  func.func @transform_3(%arg0: i32) -> (i32, i32) {
    %c0_i32 = arith.constant 0 : i32
    %c0_i32_0 = arith.constant 0 : i32
    %c0_i32_1 = arith.constant 0 : i32
    return %c0_i32, %c0_i32_0 : i32, i32
  }
  func.func @transform_4(%arg0: i32) -> (i32, i32) {
    %c0_i32 = arith.constant 0 : i32
    %c0_i32_0 = arith.constant 0 : i32
    %c0_i32_1 = arith.constant 0 : i32
    return %c0_i32, %c0_i32_0 : i32, i32
  }
  func.func @transform_5(%arg0: i32) -> (i32, i32) {
    %c0_i32 = arith.constant 0 : i32
    %c0_i32_0 = arith.constant 0 : i32
    %c0_i32_1 = arith.constant 0 : i32
    return %c0_i32, %c0_i32_0 : i32, i32
  }
  func.func @transform_6(%arg0: i32) -> (i32, i32) {
    %c0_i32 = arith.constant 0 : i32
    %c0_i32_0 = arith.constant 0 : i32
    %c0_i32_1 = arith.constant 0 : i32
    return %c0_i32, %c0_i32_0 : i32, i32
  }
  func.func @transform_7(%arg0: i32) -> (i32, i32) {
    %c0_i32 = arith.constant 0 : i32
    %c0_i32_0 = arith.constant 0 : i32
    %c0_i32_1 = arith.constant 0 : i32
    return %c0_i32, %c0_i32_0 : i32, i32
  }
  func.func @transform_8(%arg0: i32) -> (i32, i32) {
    %c0_i32 = arith.constant 0 : i32
    %c0_i32_0 = arith.constant 0 : i32
    %c0_i32_1 = arith.constant 0 : i32
    return %c0_i32, %c0_i32_0 : i32, i32
  }
  func.func @transform_9(%arg0: i32) -> (i32, i32) {
    %c0_i32 = arith.constant 0 : i32
    %c0_i32_0 = arith.constant 0 : i32
    return %arg0, %c0_i32 : i32, i32
  }
  func.func @transform_10(%arg0: i32) -> (i32, i32) {
    %c0_i32 = arith.constant 0 : i32
    %c0_i32_0 = arith.constant 0 : i32
    return %arg0, %c0_i32 : i32, i32
  }
}

</mosaic_0001>

<llo_original>
// kernel: tpu_custom_call.1
$region0: #{tpu_custom_call.1}
  #allocation0 [shape = 'u32[]', space=smem, size = 0x4, offset = 0x4, fixed_abs, tag = 'smem constant byte address 0x4 - core index']
  #allocation1 [shape = 'u32[144,128]{1,0:T(1,128)}', space=vmem, size = 0x12000, scoped, tag = 'internal scratch']
  %s0 = inlined_call_operand.hbm [shape: bf16[16,128], index: 0, kind: input, shape index: {}]
  %s1 = inlined_call_operand.hbm [shape: bf16[128,128], index: 1, kind: input, shape index: {}]
  %s2 = inlined_call_operand.hbm [shape: f32[1,128], index: 2, kind: input, shape index: {}]
  %s3 = inlined_call_operand.hbm [shape: bf16[128,128], index: 3, kind: input, shape index: {}]
  %s4 = inlined_call_operand.hbm [shape: bf16[128,128], index: 4, kind: input, shape index: {}]
  %s5 = inlined_call_operand.hbm [shape: bf16[128,128], index: 5, kind: input, shape index: {}]
  %s6 = inlined_call_operand.hbm [shape: f32[1,128], index: 6, kind: input, shape index: {}]
  %s7 = inlined_call_operand.hbm [shape: bf16[128,128], index: 7, kind: input, shape index: {}]
  %s8 = inlined_call_operand.hbm [shape: f32[1,128], index: 8, kind: input, shape index: {}]
  %s9 = inlined_call_operand.hbm [shape: bf16[16,128], index: 9, kind: output, shape index: {0}]
  %s10 = inlined_call_operand.hbm [shape: bf16[16,128], index: 10, kind: output, shape index: {1}]
  %11 = xla_tuple %s9, %s10
  %s12 = sld [smem:[#allocation0]]
  $region90: #{tpu_custom_call.1} parent=0
    _
  %s14 = ssub.s32 1, %s12
  %s15 = scalar_select 0, %s14, %s12
  $region1: #{tpu_custom_call.1} parent=0
    #allocation2 [shape = 'u8[4096]{0}', space=vmem, size = 0x1000, scoped, tag = 'input window, operand 0, single buffered']
    #allocation3 [shape = 's32[1]{0}', space=sflag, size = 0x4, scoped, tag = 'scoped memory for tpu_custom_call.1']
    #allocation4 [shape = 's32[1]{0}', space=sflag, size = 0x4, scoped, tag = 'scoped memory for tpu_custom_call.1']
    #allocation5 [shape = 'u8[32768]{0}', space=vmem, size = 0x8000, scoped, tag = 'input window, operand 1, single buffered']
    #allocation6 [shape = 's32[1]{0}', space=sflag, size = 0x4, scoped, tag = 'scoped memory for tpu_custom_call.1']
    #allocation7 [shape = 'u8[512]{0}', space=vmem, size = 0x400, scoped, tag = 'input window, operand 2, single buffered']
    #allocation8 [shape = 'u8[32768]{0}', space=vmem, size = 0x8000, scoped, tag = 'input window, operand 3, single buffered']
    #allocation9 [shape = 's32[1]{0}', space=sflag, size = 0x4, scoped, tag = 'scoped memory for tpu_custom_call.1']
    #allocation10 [shape = 'u8[32768]{0}', space=vmem, size = 0x8000, scoped, tag = 'input window, operand 4, single buffered']
    #allocation11 [shape = 'u8[32768]{0}', space=vmem, size = 0x8000, scoped, tag = 'input window, operand 5, single buffered']
    #allocation12 [shape = 's32[1]{0}', space=sflag, size = 0x4, scoped, tag = 'scoped memory for tpu_custom_call.1']
    #allocation13 [shape = 'u8[512]{0}', space=vmem, size = 0x400, scoped, tag = 'input window, operand 6, single buffered']
    #allocation14 [shape = 'u8[32768]{0}', space=vmem, size = 0x8000, scoped, tag = 'input window, operand 7, single buffered']
    #allocation15 [shape = 's32[1]{0}', space=sflag, size = 0x4, scoped, tag = 'scoped memory for tpu_custom_call.1']
    #allocation16 [shape = 'u8[512]{0}', space=vmem, size = 0x400, scoped, tag = 'input window, operand 8, single buffered']
    #allocation17 [shape = 'u8[4096]{0}', space=vmem, size = 0x1000, scoped, tag = 'output window, operand 0, single buffered']
    #allocation18 [shape = 'u8[4096]{0}', space=vmem, size = 0x1000, scoped, tag = 'output window, operand 1, single buffered']
    #allocation19 [shape = 's32[1]{0}', space=sflag, size = 0x4, scoped, tag = 'scoped memory for tpu_custom_call.1']
    %16 = vsyncpa [#allocation3], 0
    %17 = vsyncpa [#allocation6], 0
    %18 = vsyncpa [#allocation9], 0
    %19 = vsyncpa [#allocation12], 0
    %20 = vsyncpa [#allocation15], 0
    %21 = vsyncpa [#allocation4], 0
    %22 = vsyncpa [#allocation19], 0
    // Predicated region
    $region2: #{tpu_custom_call.1} parent=1 // pred_check
      _
    $region3: #{tpu_custom_call.1} parent=1 // pred_check_branch
      %24 = sbr.rel (0) target = $region5
    $region4: #{tpu_custom_call.1} parent=1 // pred_region
      %s26 = ssub.s32 128, 128
      %27 = vsyncadd [#allocation3], %s26
      %s28 = sshll.u32 [#allocation2], 4
      %s29 = int_to_ptr.vmem [resolvable:$true] %s28
      %34 = dma.hbm_to_vmem [thread:$0]  %s0, 128, %s29, [#allocation3], 64, 64, 4
    $region5: #{tpu_custom_call.1} parent=1 // pred_fallthru
      _
    // Predicated region
    $region6: #{tpu_custom_call.1} parent=1 // pred_check
      _
    $region7: #{tpu_custom_call.1} parent=1 // pred_check_branch
      %36 = sbr.rel (0) target = $region9
    $region8: #{tpu_custom_call.1} parent=1 // pred_region
      %s38 = ssub.s32 1024, 1024
      %39 = vsyncadd [#allocation6], %s38
      %s40 = sshll.u32 [#allocation5], 4
      %s41 = int_to_ptr.vmem [resolvable:$true] %s40
      %46 = dma.hbm_to_vmem [thread:$0]  %s1, 1024, %s41, [#allocation6], 64, 64, 4
    $region9: #{tpu_custom_call.1} parent=1 // pred_fallthru
      _
    // Predicated region
    $region10: #{tpu_custom_call.1} parent=1 // pred_check
      _
    $region11: #{tpu_custom_call.1} parent=1 // pred_check_branch
      %48 = sbr.rel (0) target = $region13
    $region12: #{tpu_custom_call.1} parent=1 // pred_region
      %s50 = ssub.s32 16, 16
      %51 = vsyncadd [#allocation6], %s50
      %s53 = sshll.u32 [#allocation7], 4
      %s54 = int_to_ptr.vmem [resolvable:$true] %s53
      %56 = dma.hbm_to_vmem [thread:$0]  %s2, 16, %s54, [#allocation6]
    $region13: #{tpu_custom_call.1} parent=1 // pred_fallthru
      _
    // Predicated region
    $region14: #{tpu_custom_call.1} parent=1 // pred_check
      _
    $region15: #{tpu_custom_call.1} parent=1 // pred_check_branch
      %58 = sbr.rel (0) target = $region17
    $region16: #{tpu_custom_call.1} parent=1 // pred_region
      %s60 = ssub.s32 1024, 1024
      %61 = vsyncadd [#allocation9], %s60
      %s62 = sshll.u32 [#allocation8], 4
      %s63 = int_to_ptr.vmem [resolvable:$true] %s62
      %68 = dma.hbm_to_vmem [thread:$0]  %s3, 1024, %s63, [#allocation9], 64, 64, 4
    $region17: #{tpu_custom_call.1} parent=1 // pred_fallthru
      _
    // Predicated region
    $region18: #{tpu_custom_call.1} parent=1 // pred_check
      _
    $region19: #{tpu_custom_call.1} parent=1 // pred_check_branch
      %70 = sbr.rel (0) target = $region21
    $region20: #{tpu_custom_call.1} parent=1 // pred_region
      %s72 = ssub.s32 1024, 1024
      %73 = vsyncadd [#allocation9], %s72
      %s74 = sshll.u32 [#allocation10], 4
      %s75 = int_to_ptr.vmem [resolvable:$true] %s74
      %80 = dma.hbm_to_vmem [thread:$0]  %s4, 1024, %s75, [#allocation9], 64, 64, 4
    $region21: #{tpu_custom_call.1} parent=1 // pred_fallthru
      _
    // Predicated region
    $region22: #{tpu_custom_call.1} parent=1 // pred_check
      _
    $region23: #{tpu_custom_call.1} parent=1 // pred_check_branch
      %82 = sbr.rel (0) target = $region25
    $region24: #{tpu_custom_call.1} parent=1 // pred_region
      %s84 = ssub.s32 1024, 1024
      %85 = vsyncadd [#allocation12], %s84
      %s86 = sshll.u32 [#allocation11], 4
      %s87 = int_to_ptr.vmem [resolvable:$true] %s86
      %92 = dma.hbm_to_vmem [thread:$0]  %s5, 1024, %s87, [#allocation12], 64, 64, 4
    $region25: #{tpu_custom_call.1} parent=1 // pred_fallthru
      _
    // Predicated region
    $region26: #{tpu_custom_call.1} parent=1 // pred_check
      _
    $region27: #{tpu_custom_call.1} parent=1 // pred_check_branch
      %94 = sbr.rel (0) target = $region29
    $region28: #{tpu_custom_call.1} parent=1 // pred_region
      %s96 = ssub.s32 16, 16
      %97 = vsyncadd [#allocation12], %s96
      %s99 = sshll.u32 [#allocation13], 4
      %s100 = int_to_ptr.vmem [resolvable:$true] %s99
      %102 = dma.hbm_to_vmem [thread:$0]  %s6, 16, %s100, [#allocation12]
    $region29: #{tpu_custom_call.1} parent=1 // pred_fallthru
      _
    // Predicated region
    $region30: #{tpu_custom_call.1} parent=1 // pred_check
      _
    $region31: #{tpu_custom_call.1} parent=1 // pred_check_branch
      %104 = sbr.rel (0) target = $region33
    $region32: #{tpu_custom_call.1} parent=1 // pred_region
      %s106 = ssub.s32 1024, 1024
      %107 = vsyncadd [#allocation15], %s106
      %s108 = sshll.u32 [#allocation14], 4
      %s109 = int_to_ptr.vmem [resolvable:$true] %s108
      %114 = dma.hbm_to_vmem [thread:$0]  %s7, 1024, %s109, [#allocation15], 64, 64, 4
    $region33: #{tpu_custom_call.1} parent=1 // pred_fallthru
      _
    // Predicated region
    $region34: #{tpu_custom_call.1} parent=1 // pred_check
      _
    $region35: #{tpu_custom_call.1} parent=1 // pred_check_branch
      %116 = sbr.rel (0) target = $region37
    $region36: #{tpu_custom_call.1} parent=1 // pred_region
      %s118 = ssub.s32 16, 16
      %119 = vsyncadd [#allocation15], %s118
      %s121 = sshll.u32 [#allocation16], 4
      %s122 = int_to_ptr.vmem [resolvable:$true] %s121
      %124 = dma.hbm_to_vmem [thread:$0]  %s8, 16, %s122, [#allocation15]
    $region37: #{tpu_custom_call.1} parent=1 // pred_fallthru
      _
    // Predicated region
    $region38: #{tpu_custom_call.1} parent=1 // pred_check
      _
    $region39: #{tpu_custom_call.1} parent=1 // pred_check_branch
      %126 = sbr.rel (0) target = $region41
    $region40: #{tpu_custom_call.1} parent=1 // pred_region
      %127 = dma.done [#allocation3], 128
    $region41: #{tpu_custom_call.1} parent=1 // pred_fallthru
      _
    // Predicated region
    $region42: #{tpu_custom_call.1} parent=1 // pred_check
      _
    $region43: #{tpu_custom_call.1} parent=1 // pred_check_branch
      %129 = sbr.rel (0) target = $region45
    $region44: #{tpu_custom_call.1} parent=1 // pred_region
      %130 = dma.done [#allocation6], 1024
    $region45: #{tpu_custom_call.1} parent=1 // pred_fallthru
      _
    // Predicated region
    $region46: #{tpu_custom_call.1} parent=1 // pred_check
      _
    $region47: #{tpu_custom_call.1} parent=1 // pred_check_branch
      %132 = sbr.rel (0) target = $region49
    $region48: #{tpu_custom_call.1} parent=1 // pred_region
      %133 = dma.done [#allocation6], 16
    $region49: #{tpu_custom_call.1} parent=1 // pred_fallthru
      _
    // Predicated region
    $region50: #{tpu_custom_call.1} parent=1 // pred_check
      _
    $region51: #{tpu_custom_call.1} parent=1 // pred_check_branch
      %135 = sbr.rel (0) target = $region53
    $region52: #{tpu_custom_call.1} parent=1 // pred_region
      %136 = dma.done [#allocation9], 1024
    $region53: #{tpu_custom_call.1} parent=1 // pred_fallthru
      _
    // Predicated region
    $region54: #{tpu_custom_call.1} parent=1 // pred_check
      _
    $region55: #{tpu_custom_call.1} parent=1 // pred_check_branch
      %138 = sbr.rel (0) target = $region57
    $region56: #{tpu_custom_call.1} parent=1 // pred_region
      %139 = dma.done [#allocation9], 1024
    $region57: #{tpu_custom_call.1} parent=1 // pred_fallthru
      _
    // Predicated region
    $region58: #{tpu_custom_call.1} parent=1 // pred_check
      _
    $region59: #{tpu_custom_call.1} parent=1 // pred_check_branch
      %141 = sbr.rel (0) target = $region61
    $region60: #{tpu_custom_call.1} parent=1 // pred_region
      %142 = dma.done [#allocation12], 1024
    $region61: #{tpu_custom_call.1} parent=1 // pred_fallthru
      _
    // Predicated region
    $region62: #{tpu_custom_call.1} parent=1 // pred_check
      _
    $region63: #{tpu_custom_call.1} parent=1 // pred_check_branch
      %144 = sbr.rel (0) target = $region65
    $region64: #{tpu_custom_call.1} parent=1 // pred_region
      %145 = dma.done [#allocation12], 16
    $region65: #{tpu_custom_call.1} parent=1 // pred_fallthru
      _
    // Predicated region
    $region66: #{tpu_custom_call.1} parent=1 // pred_check
      _
    $region67: #{tpu_custom_call.1} parent=1 // pred_check_branch
      %147 = sbr.rel (0) target = $region69
    $region68: #{tpu_custom_call.1} parent=1 // pred_region
      %148 = dma.done [#allocation15], 1024
    $region69: #{tpu_custom_call.1} parent=1 // pred_fallthru
      _
    // Predicated region
    $region70: #{tpu_custom_call.1} parent=1 // pred_check
      _
    $region71: #{tpu_custom_call.1} parent=1 // pred_check_branch
      %150 = sbr.rel (0) target = $region73
    $region72: #{tpu_custom_call.1} parent=1 // pred_region
      %151 = dma.done [#allocation15], 16
    $region73: #{tpu_custom_call.1} parent=1 // pred_fallthru
      _
    %v153 = vld [vmem:[#allocation2] sm:$0xf]
    %v154 = vld [vmem:[#allocation2 + $0x4] sm:$0xf]
    %v155 = vlaneseq
    %v156 = vand.u32 %v155, 127
    %v157 = vlaneseq
    %v158 = vshrl.u32 %v157, 7
    %v159 = vadd.s32 %v158, 8
    %vm160 = vcmp.lt.s32.totalorder %v158, 0
    %v161 = vsub.s32 0, %v158
    %v162 = vsel %vm160, %v161, %v158
    %v163 = vshrl.u32 %v162, 1
    %v164 = vand.u32 %v162, 1
    %v165 = vsub.s32 0, %v164
    %v166 = vsel %vm160, %v165, %v164
    %vm167 = vcmp.lt.s32.totalorder %v159, 0
    %v168 = vsub.s32 0, %v159
    %v169 = vsel %vm167, %v168, %v159
    %v170 = vshrl.u32 %v169, 1
    %v171 = vand.u32 %v169, 1
    %v172 = vsub.s32 0, %v171
    %v173 = vsel %vm167, %v172, %v171
    %vm174 = vcmp.ne.s32.totalorder %v166, 0
    %vm175 = vcmp.ne.s32.totalorder %v173, 0
    %vm176 = vcmp.lt.s32.totalorder %v166, 0
    %vm177 = vcmp.lt.s32.totalorder %v173, 0
    %vm178 = vmand %vm176, %vm174
    %vm179 = vmand %vm177, %vm175
    %v180 = vadd.s32 %v166, 2
    %v181 = vadd.s32 %v173, 2
    %v182 = vsel %vm178, %v180, %v166
    %v183 = vsel %vm179, %v181, %v173
    %v184 = vld [vmem:[#allocation5] sm:$0xf]
    %v185 = vld [vmem:[#allocation5 + $0x4] sm:$0xf]
    %v186 = vld [vmem:[#allocation5 + $0x8] sm:$0xf]
    %v187 = vld [vmem:[#allocation5 + $0xc] sm:$0xf]
    %v188 = vld [vmem:[#allocation5 + $0x10] sm:$0xf]
    %v189 = vld [vmem:[#allocation5 + $0x14] sm:$0xf]
    %v190 = vld [vmem:[#allocation5 + $0x18] sm:$0xf]
    %v191 = vld [vmem:[#allocation5 + $0x1c] sm:$0xf]
    %v192 = vld [vmem:[#allocation5 + $0x20] sm:$0xf]
    %v193 = vld [vmem:[#allocation5 + $0x24] sm:$0xf]
    %v194 = vld [vmem:[#allocation5 + $0x28] sm:$0xf]
    %v195 = vld [vmem:[#allocation5 + $0x2c] sm:$0xf]
    %v196 = vld [vmem:[#allocation5 + $0x30] sm:$0xf]
    %v197 = vld [vmem:[#allocation5 + $0x34] sm:$0xf]
    %v198 = vld [vmem:[#allocation5 + $0x38] sm:$0xf]
    %v199 = vld [vmem:[#allocation5 + $0x3c] sm:$0xf]
    %v200 = vld [vmem:[#allocation7] sm:$0x1]
    %v202 = vlaneseq
    %v203 = vshrl.u32 %v202, 7
    %v204 = vsub.s32 0, %v203
    %v205 = vrot.slane %v200, %v204
    %v209 = vunpack.c.l.b16 %v153
    %v210 = vunpack.c.l.b16 %v154
    %v211 = vpack.c.b16 %v210, %v209
    %v229 = vunpack.c.l.b16 %v184
    %v230 = vunpack.c.l.b16 %v185
    %v231 = vunpack.c.l.b16 %v186
    %v232 = vunpack.c.l.b16 %v187
    %v233 = vunpack.c.l.b16 %v188
    %v234 = vunpack.c.l.b16 %v189
    %v235 = vunpack.c.l.b16 %v190
    %v236 = vunpack.c.l.b16 %v191
    %v237 = vunpack.c.l.b16 %v192
    %v238 = vunpack.c.l.b16 %v193
    %v239 = vunpack.c.l.b16 %v194
    %v240 = vunpack.c.l.b16 %v195
    %v241 = vunpack.c.l.b16 %v196
    %v242 = vunpack.c.l.b16 %v197
    %v243 = vunpack.c.l.b16 %v198
    %v244 = vunpack.c.l.b16 %v199
    %v245 = vpack.c.b16 %v230, %v229
    %v246 = vpack.c.b16 %v232, %v231
    %v247 = vpack.c.b16 %v234, %v233
    %v248 = vpack.c.b16 %v236, %v235
    %v249 = vpack.c.b16 %v238, %v237
    %v250 = vpack.c.b16 %v240, %v239
    %v251 = vpack.c.b16 %v242, %v241
    %v252 = vpack.c.b16 %v244, %v243
    %261 = vmatprep.subr.bf16.mxu0 0
    %262 = vmatpush1.bf16.msra.mxu0 %v245
    %263 = vmatprep.subr.bf16.mxu0 0
    %264 = vmatpush1.bf16.msra.mxu0 %v246
    %265 = vmatprep.subr.bf16.mxu0 0
    %266 = vmatpush1.bf16.msra.mxu0 %v247
    %267 = vmatprep.subr.bf16.mxu0 0
    %268 = vmatpush1.bf16.msra.mxu0 %v248
    %269 = vmatprep.subr.bf16.mxu0 0
    %270 = vmatpush1.bf16.msra.mxu0 %v249
    %271 = vmatprep.subr.bf16.mxu0 0
    %272 = vmatpush1.bf16.msra.mxu0 %v250
    %273 = vmatprep.subr.bf16.mxu0 0
    %274 = vmatpush1.bf16.msra.mxu0 %v251
    %275 = vmatprep.subr.bf16.mxu0 0
    %276 = vmatpush1.bf16.msra.mxu0 %v252
    %277 = vmatprep.subr.bf16.mxu0 0
    %278 = vmatpush1.bf16.msra.mxu0 0
    %279 = vmatprep.subr.bf16.mxu0 0
    %280 = vmatpush1.bf16.msra.mxu0 0
    %281 = vmatprep.subr.bf16.mxu0 0
    %282 = vmatpush1.bf16.msra.mxu0 0
    %283 = vmatprep.subr.bf16.mxu0 0
    %284 = vmatpush1.bf16.msra.mxu0 0
    %285 = vmatprep.subr.bf16.mxu0 0
    %286 = vmatpush1.bf16.msra.mxu0 0
    %287 = vmatprep.subr.bf16.mxu0 0
    %288 = vmatpush1.bf16.msra.mxu0 0
    %289 = vmatprep.subr.bf16.mxu0 0
    %290 = vmatpush1.bf16.msra.mxu0 0
    %291 = vmatprep.subr.bf16.mxu0 0
    %292 = vmatpush1.bf16.msra.mxu0 0
    %293 = vmatprep.mubr.bf16.mxu0 0
    %294 = vmatmul.mubr.bf16.gmra.mrb[0].mxu0 %v211
    %v295 = vpop.f32.mrb[0].mxu0
    %v296 = vadd.f32 %v205, %v295
    %v297 = vpop.f32.mrb[0].mxu0
    %v298 = vpop.f32.mrb[0].mxu0
    %v299 = vadd.f32 %v205, %v298
    %v300 = vpop.f32.mrb[0].mxu0
    %301 = vdwg.mxu0
    %vm302 = vcmp.lt.s32.totalorder %v156, 0
    %v303 = vsub.s32 0, %v156
    %v304 = vsel %vm302, %v303, %v156
    %v305 = vshrl.u32 %v304, 4
    %v306 = vand.u32 %v304, 15
    %v307 = vsub.s32 0, %v306
    %v308 = vsel %vm302, %v307, %v306
    %vm309 = vcmp.ne.s32.totalorder %v308, 0
    %vm310 = vcmp.lt.s32.totalorder %v308, 0
    %vm311 = vmand %vm310, %vm309
    %v312 = vadd.s32 %v308, 16
    %v313 = vsel %vm311, %v312, %v308
    %vm314 = vcmp.lt.s32.totalorder %v313, 8
    %v315 = vmax.f32 %v296, 0.0
    %v316 = vmax.f32 %v299, 0.0
    %v317 = vsel %vm314, %v315, %v296
    %v318 = vsel %vm314, %v316, %v299
    %v319 = vpack.c.bf16 %v318, %v317
    %v320 = vld [vmem:[#allocation8] sm:$0xf]
    %v321 = vld [vmem:[#allocation8 + $0x4] sm:$0xf]
    %v322 = vld [vmem:[#allocation8 + $0x8] sm:$0xf]
    %v323 = vld [vmem:[#allocation8 + $0xc] sm:$0xf]
    %v324 = vld [vmem:[#allocation8 + $0x10] sm:$0xf]
    %v325 = vld [vmem:[#allocation8 + $0x14] sm:$0xf]
    %v326 = vld [vmem:[#allocation8 + $0x18] sm:$0xf]
    %v327 = vld [vmem:[#allocation8 + $0x1c] sm:$0xf]
    %v328 = vld [vmem:[#allocation8 + $0x20] sm:$0xf]
    %v329 = vld [vmem:[#allocation8 + $0x24] sm:$0xf]
    %v330 = vld [vmem:[#allocation8 + $0x28] sm:$0xf]
    %v331 = vld [vmem:[#allocation8 + $0x2c] sm:$0xf]
    %v332 = vld [vmem:[#allocation8 + $0x30] sm:$0xf]
    %v333 = vld [vmem:[#allocation8 + $0x34] sm:$0xf]
    %v334 = vld [vmem:[#allocation8 + $0x38] sm:$0xf]
    %v335 = vld [vmem:[#allocation8 + $0x3c] sm:$0xf]
    %v336 = vrot.slane %v317, 7
    %v337 = vrot.slane %v318, 7
    %vm338 = vcmp.lt.s32.totalorder %v158, 1
    %v339 = vsel %vm338, %v336, %v337
    %v340 = vsel %vm338, %v337, %v336
    %v341 = vpack.c.bf16 %v339, %v340
    %v342 = vrot.slane %v317, 1
    %v343 = vrot.slane %v318, 1
    %vm344 = vcmp.lt.s32.totalorder %v158, 7
    %v345 = vsel %vm344, %v342, %v343
    %v346 = vsel %vm344, %v343, %v342
    %v347 = vpack.c.bf16 %v346, %v345
    %v348 = vld [vmem:[#allocation10] sm:$0xf]
    %v349 = vld [vmem:[#allocation10 + $0x4] sm:$0xf]
    %v350 = vld [vmem:[#allocation10 + $0x8] sm:$0xf]
    %v351 = vld [vmem:[#allocation10 + $0xc] sm:$0xf]
    %v352 = vld [vmem:[#allocation10 + $0x10] sm:$0xf]
    %v353 = vld [vmem:[#allocation10 + $0x14] sm:$0xf]
    %v354 = vld [vmem:[#allocation10 + $0x18] sm:$0xf]
    %v355 = vld [vmem:[#allocation10 + $0x1c] sm:$0xf]
    %v356 = vld [vmem:[#allocation10 + $0x20] sm:$0xf]
    %v357 = vld [vmem:[#allocation10 + $0x24] sm:$0xf]
    %v358 = vld [vmem:[#allocation10 + $0x28] sm:$0xf]
    %v359 = vld [vmem:[#allocation10 + $0x2c] sm:$0xf]
    %v360 = vld [vmem:[#allocation10 + $0x30] sm:$0xf]
    %v361 = vld [vmem:[#allocation10 + $0x34] sm:$0xf]
    %v362 = vld [vmem:[#allocation10 + $0x38] sm:$0xf]
    %v363 = vld [vmem:[#allocation10 + $0x3c] sm:$0xf]
    %v380 = vunpack.c.l.b16 %v348
    %v381 = vunpack.c.l.b16 %v349
    %v382 = vunpack.c.l.b16 %v350
    %v383 = vunpack.c.l.b16 %v351
    %v384 = vunpack.c.l.b16 %v352
    %v385 = vunpack.c.l.b16 %v353
    %v386 = vunpack.c.l.b16 %v354
    %v387 = vunpack.c.l.b16 %v355
    %v388 = vunpack.c.l.b16 %v356
    %v389 = vunpack.c.l.b16 %v357
    %v390 = vunpack.c.l.b16 %v358
    %v391 = vunpack.c.l.b16 %v359
    %v392 = vunpack.c.l.b16 %v360
    %v393 = vunpack.c.l.b16 %v361
    %v394 = vunpack.c.l.b16 %v362
    %v395 = vunpack.c.l.b16 %v363
    %v396 = vpack.c.b16 %v381, %v380
    %v397 = vpack.c.b16 %v383, %v382
    %v398 = vpack.c.b16 %v385, %v384
    %v399 = vpack.c.b16 %v387, %v386
    %v400 = vpack.c.b16 %v389, %v388
    %v401 = vpack.c.b16 %v391, %v390
    %v402 = vpack.c.b16 %v393, %v392
    %v403 = vpack.c.b16 %v395, %v394
    %412 = vmatprep.subr.bf16.mxu0 0
    %413 = vmatpush1.bf16.msra.mxu0 %v396
    %414 = vmatprep.subr.bf16.mxu0 0
    %415 = vmatpush1.bf16.msra.mxu0 %v397
    %416 = vmatprep.subr.bf16.mxu0 0
    %417 = vmatpush1.bf16.msra.mxu0 %v398
    %418 = vmatprep.subr.bf16.mxu0 0
    %419 = vmatpush1.bf16.msra.mxu0 %v399
    %420 = vmatprep.subr.bf16.mxu0 0
    %421 = vmatpush1.bf16.msra.mxu0 %v400
    %422 = vmatprep.subr.bf16.mxu0 0
    %423 = vmatpush1.bf16.msra.mxu0 %v401
    %424 = vmatprep.subr.bf16.mxu0 0
    %425 = vmatpush1.bf16.msra.mxu0 %v402
    %426 = vmatprep.subr.bf16.mxu0 0
    %427 = vmatpush1.bf16.msra.mxu0 %v403
    %428 = vmatprep.subr.bf16.mxu0 0
    %429 = vmatpush1.bf16.msra.mxu0 0
    %430 = vmatprep.subr.bf16.mxu0 0
    %431 = vmatpush1.bf16.msra.mxu0 0
    %432 = vmatprep.subr.bf16.mxu0 0
    %433 = vmatpush1.bf16.msra.mxu0 0
    %434 = vmatprep.subr.bf16.mxu0 0
    %435 = vmatpush1.bf16.msra.mxu0 0
    %436 = vmatprep.subr.bf16.mxu0 0
    %437 = vmatpush1.bf16.msra.mxu0 0
    %438 = vmatprep.subr.bf16.mxu0 0
    %439 = vmatpush1.bf16.msra.mxu0 0
    %440 = vmatprep.subr.bf16.mxu0 0
    %441 = vmatpush1.bf16.msra.mxu0 0
    %442 = vmatprep.subr.bf16.mxu0 0
    %443 = vmatpush1.bf16.msra.mxu0 0
    %444 = vmatprep.mubr.bf16.mxu0 0
    %445 = vmatmul.mubr.bf16.gmra.mrb[0].mxu0 %v341
    %v446 = vpop.f32.mrb[0].mxu0
    %v447 = vadd.f32 0.0, %v446
    %v448 = vpop.f32.mrb[0].mxu0
    %v449 = vpop.f32.mrb[0].mxu0
    %v450 = vadd.f32 0.0, %v449
    %v451 = vpop.f32.mrb[0].mxu0
    %452 = vdwg.mxu0
    %v453 = vld [vmem:[#allocation11] sm:$0xf]
    %v454 = vld [vmem:[#allocation11 + $0x4] sm:$0xf]
    %v455 = vld [vmem:[#allocation11 + $0x8] sm:$0xf]
    %v456 = vld [vmem:[#allocation11 + $0xc] sm:$0xf]
    %v457 = vld [vmem:[#allocation11 + $0x10] sm:$0xf]
    %v458 = vld [vmem:[#allocation11 + $0x14] sm:$0xf]
    %v459 = vld [vmem:[#allocation11 + $0x18] sm:$0xf]
    %v460 = vld [vmem:[#allocation11 + $0x1c] sm:$0xf]
    %v461 = vld [vmem:[#allocation11 + $0x20] sm:$0xf]
    %v462 = vld [vmem:[#allocation11 + $0x24] sm:$0xf]
    %v463 = vld [vmem:[#allocation11 + $0x28] sm:$0xf]
    %v464 = vld [vmem:[#allocation11 + $0x2c] sm:$0xf]
    %v465 = vld [vmem:[#allocation11 + $0x30] sm:$0xf]
    %v466 = vld [vmem:[#allocation11 + $0x34] sm:$0xf]
    %v467 = vld [vmem:[#allocation11 + $0x38] sm:$0xf]
    %v468 = vld [vmem:[#allocation11 + $0x3c] sm:$0xf]
    %v485 = vunpack.c.l.b16 %v453
    %v486 = vunpack.c.l.b16 %v454
    %v487 = vunpack.c.l.b16 %v455
    %v488 = vunpack.c.l.b16 %v456
    %v489 = vunpack.c.l.b16 %v457
    %v490 = vunpack.c.l.b16 %v458
    %v491 = vunpack.c.l.b16 %v459
    %v492 = vunpack.c.l.b16 %v460
    %v493 = vunpack.c.l.b16 %v461
    %v494 = vunpack.c.l.b16 %v462
    %v495 = vunpack.c.l.b16 %v463
    %v496 = vunpack.c.l.b16 %v464
    %v497 = vunpack.c.l.b16 %v465
    %v498 = vunpack.c.l.b16 %v466
    %v499 = vunpack.c.l.b16 %v467
    %v500 = vunpack.c.l.b16 %v468
    %v501 = vpack.c.b16 %v486, %v485
    %v502 = vpack.c.b16 %v488, %v487
    %v503 = vpack.c.b16 %v490, %v489
    %v504 = vpack.c.b16 %v492, %v491
    %v505 = vpack.c.b16 %v494, %v493
    %v506 = vpack.c.b16 %v496, %v495
    %v507 = vpack.c.b16 %v498, %v497
    %v508 = vpack.c.b16 %v500, %v499
    %517 = vmatprep.subr.bf16.mxu0 0
    %518 = vmatpush1.bf16.msra.mxu0 %v501
    %519 = vmatprep.subr.bf16.mxu0 0
    %520 = vmatpush1.bf16.msra.mxu0 %v502
    %521 = vmatprep.subr.bf16.mxu0 0
    %522 = vmatpush1.bf16.msra.mxu0 %v503
    %523 = vmatprep.subr.bf16.mxu0 0
    %524 = vmatpush1.bf16.msra.mxu0 %v504
    %525 = vmatprep.subr.bf16.mxu0 0
    %526 = vmatpush1.bf16.msra.mxu0 %v505
    %527 = vmatprep.subr.bf16.mxu0 0
    %528 = vmatpush1.bf16.msra.mxu0 %v506
    %529 = vmatprep.subr.bf16.mxu0 0
    %530 = vmatpush1.bf16.msra.mxu0 %v507
    %531 = vmatprep.subr.bf16.mxu0 0
    %532 = vmatpush1.bf16.msra.mxu0 %v508
    %533 = vmatprep.subr.bf16.mxu0 0
    %534 = vmatpush1.bf16.msra.mxu0 0
    %535 = vmatprep.subr.bf16.mxu0 0
    %536 = vmatpush1.bf16.msra.mxu0 0
    %537 = vmatprep.subr.bf16.mxu0 0
    %538 = vmatpush1.bf16.msra.mxu0 0
    %539 = vmatprep.subr.bf16.mxu0 0
    %540 = vmatpush1.bf16.msra.mxu0 0
    %541 = vmatprep.subr.bf16.mxu0 0
    %542 = vmatpush1.bf16.msra.mxu0 0
    %543 = vmatprep.subr.bf16.mxu0 0
    %544 = vmatpush1.bf16.msra.mxu0 0
    %545 = vmatprep.subr.bf16.mxu0 0
    %546 = vmatpush1.bf16.msra.mxu0 0
    %547 = vmatprep.subr.bf16.mxu0 0
    %548 = vmatpush1.bf16.msra.mxu0 0
    %549 = vmatprep.mubr.bf16.mxu0 0
    %550 = vmatmul.mubr.bf16.gmra.mrb[0].mxu0 %v347
    %v551 = vpop.f32.mrb[0].mxu0
    %v552 = vadd.f32 0.0, %v551
    %v553 = vpop.f32.mrb[0].mxu0
    %v554 = vpop.f32.mrb[0].mxu0
    %v555 = vadd.f32 0.0, %v554
    %v556 = vpop.f32.mrb[0].mxu0
    %557 = vdwg.mxu0
    %vm558 = vcmp.gt.s32.totalorder %v182, 0
    %vm559 = vcmp.gt.s32.totalorder %v183, 0
    %v560 = vsel %vm558, %v447, 0.0
    %v561 = vsel %vm559, %v450, 0.0
    %v578 = vunpack.c.l.b16 %v320
    %v579 = vunpack.c.l.b16 %v321
    %v580 = vunpack.c.l.b16 %v322
    %v581 = vunpack.c.l.b16 %v323
    %v582 = vunpack.c.l.b16 %v324
    %v583 = vunpack.c.l.b16 %v325
    %v584 = vunpack.c.l.b16 %v326
    %v585 = vunpack.c.l.b16 %v327
    %v586 = vunpack.c.l.b16 %v328
    %v587 = vunpack.c.l.b16 %v329
    %v588 = vunpack.c.l.b16 %v330
    %v589 = vunpack.c.l.b16 %v331
    %v590 = vunpack.c.l.b16 %v332
    %v591 = vunpack.c.l.b16 %v333
    %v592 = vunpack.c.l.b16 %v334
    %v593 = vunpack.c.l.b16 %v335
    %v594 = vpack.c.b16 %v579, %v578
    %v595 = vpack.c.b16 %v581, %v580
    %v596 = vpack.c.b16 %v583, %v582
    %v597 = vpack.c.b16 %v585, %v584
    %v598 = vpack.c.b16 %v587, %v586
    %v599 = vpack.c.b16 %v589, %v588
    %v600 = vpack.c.b16 %v591, %v590
    %v601 = vpack.c.b16 %v593, %v592
    %610 = vmatprep.subr.bf16.mxu0 0
    %611 = vmatpush1.bf16.msra.mxu0 %v594
    %612 = vmatprep.subr.bf16.mxu0 0
    %613 = vmatpush1.bf16.msra.mxu0 %v595
    %614 = vmatprep.subr.bf16.mxu0 0
    %615 = vmatpush1.bf16.msra.mxu0 %v596
    %616 = vmatprep.subr.bf16.mxu0 0
    %617 = vmatpush1.bf16.msra.mxu0 %v597
    %618 = vmatprep.subr.bf16.mxu0 0
    %619 = vmatpush1.bf16.msra.mxu0 %v598
    %620 = vmatprep.subr.bf16.mxu0 0
    %621 = vmatpush1.bf16.msra.mxu0 %v599
    %622 = vmatprep.subr.bf16.mxu0 0
    %623 = vmatpush1.bf16.msra.mxu0 %v600
    %624 = vmatprep.subr.bf16.mxu0 0
    %625 = vmatpush1.bf16.msra.mxu0 %v601
    %626 = vmatprep.subr.bf16.mxu0 0
    %627 = vmatpush1.bf16.msra.mxu0 0
    %628 = vmatprep.subr.bf16.mxu0 0
    %629 = vmatpush1.bf16.msra.mxu0 0
    %630 = vmatprep.subr.bf16.mxu0 0
    %631 = vmatpush1.bf16.msra.mxu0 0
    %632 = vmatprep.subr.bf16.mxu0 0
    %633 = vmatpush1.bf16.msra.mxu0 0
    %634 = vmatprep.subr.bf16.mxu0 0
    %635 = vmatpush1.bf16.msra.mxu0 0
    %636 = vmatprep.subr.bf16.mxu0 0
    %637 = vmatpush1.bf16.msra.mxu0 0
    %638 = vmatprep.subr.bf16.mxu0 0
    %639 = vmatpush1.bf16.msra.mxu0 0
    %640 = vmatprep.subr.bf16.mxu0 0
    %641 = vmatpush1.bf16.msra.mxu0 0
    %642 = vmatprep.mubr.bf16.mxu0 0
    %643 = vmatmul.mubr.bf16.gmra.mrb[0].mxu0 %v319
    %v644 = vpop.f32.mrb[0].mxu0
    %v645 = vadd.f32 %v560, %v644
    %v646 = vpop.f32.mrb[0].mxu0
    %v647 = vpop.f32.mrb[0].mxu0
    %v648 = vadd.f32 %v561, %v647
    %v649 = vpop.f32.mrb[0].mxu0
    %650 = vdwg.mxu0
    %vm651 = vcmp.lt.s32.totalorder %v182, 1
    %vm652 = vcmp.lt.s32.totalorder %v183, 1
    %v653 = vsel %vm651, %v552, 0.0
    %v654 = vsel %vm652, %v555, 0.0
    %v655 = vadd.f32 %v645, %v653
    %v656 = vadd.f32 %v648, %v654
    %v657 = vld [vmem:[#allocation13] sm:$0x1]
    %v659 = vlaneseq
    %v660 = vshrl.u32 %v659, 7
    %v661 = vsub.s32 0, %v660
    %v662 = vrot.slane %v657, %v661
    %v664 = vadd.f32 %v655, %v662
    %v665 = vadd.f32 %v656, %v662
    %v666 = vmax.f32 %v664, 0.0
    %v667 = vmax.f32 %v665, 0.0
    %v668 = vpack.c.bf16 %v667, %v666
    %v670 = vunpack.c.l.b16 %v668
    %v671 = vunpack.c.h.b16 %v668
    %v672 = vpack.c.b16 %v670, %v670
    %v673 = vpack.c.b16 %v671, %v671
    %676 = vst [vmem:[#allocation18] sm:$0xf] %v672
    %677 = vst [vmem:[#allocation18 + $0x4] sm:$0xf] %v673
    %v678 = vld [vmem:[#allocation14] sm:$0xf]
    %v679 = vld [vmem:[#allocation14 + $0x4] sm:$0xf]
    %v680 = vld [vmem:[#allocation14 + $0x8] sm:$0xf]
    %v681 = vld [vmem:[#allocation14 + $0xc] sm:$0xf]
    %v682 = vld [vmem:[#allocation14 + $0x10] sm:$0xf]
    %v683 = vld [vmem:[#allocation14 + $0x14] sm:$0xf]
    %v684 = vld [vmem:[#allocation14 + $0x18] sm:$0xf]
    %v685 = vld [vmem:[#allocation14 + $0x1c] sm:$0xf]
    %v686 = vld [vmem:[#allocation14 + $0x20] sm:$0xf]
    %v687 = vld [vmem:[#allocation14 + $0x24] sm:$0xf]
    %v688 = vld [vmem:[#allocation14 + $0x28] sm:$0xf]
    %v689 = vld [vmem:[#allocation14 + $0x2c] sm:$0xf]
    %v690 = vld [vmem:[#allocation14 + $0x30] sm:$0xf]
    %v691 = vld [vmem:[#allocation14 + $0x34] sm:$0xf]
    %v692 = vld [vmem:[#allocation14 + $0x38] sm:$0xf]
    %v693 = vld [vmem:[#allocation14 + $0x3c] sm:$0xf]
    %v694 = vld [vmem:[#allocation16] sm:$0x1]
    %v696 = vlaneseq
    %v697 = vshrl.u32 %v696, 7
    %v698 = vsub.s32 0, %v697
    %v699 = vrot.slane %v694, %v698
    %v717 = vunpack.c.l.b16 %v678
    %v718 = vunpack.c.l.b16 %v679
    %v719 = vunpack.c.l.b16 %v680
    %v720 = vunpack.c.l.b16 %v681
    %v721 = vunpack.c.l.b16 %v682
    %v722 = vunpack.c.l.b16 %v683
    %v723 = vunpack.c.l.b16 %v684
    %v724 = vunpack.c.l.b16 %v685
    %v725 = vunpack.c.l.b16 %v686
    %v726 = vunpack.c.l.b16 %v687
    %v727 = vunpack.c.l.b16 %v688
    %v728 = vunpack.c.l.b16 %v689
    %v729 = vunpack.c.l.b16 %v690
    %v730 = vunpack.c.l.b16 %v691
    %v731 = vunpack.c.l.b16 %v692
    %v732 = vunpack.c.l.b16 %v693
    %v733 = vpack.c.b16 %v718, %v717
    %v734 = vpack.c.b16 %v720, %v719
    %v735 = vpack.c.b16 %v722, %v721
    %v736 = vpack.c.b16 %v724, %v723
    %v737 = vpack.c.b16 %v726, %v725
    %v738 = vpack.c.b16 %v728, %v727
    %v739 = vpack.c.b16 %v730, %v729
    %v740 = vpack.c.b16 %v732, %v731
    %749 = vmatprep.subr.bf16.mxu0 0
    %750 = vmatpush1.bf16.msra.mxu0 %v733
    %751 = vmatprep.subr.bf16.mxu0 0
    %752 = vmatpush1.bf16.msra.mxu0 %v734
    %753 = vmatprep.subr.bf16.mxu0 0
    %754 = vmatpush1.bf16.msra.mxu0 %v735
    %755 = vmatprep.subr.bf16.mxu0 0
    %756 = vmatpush1.bf16.msra.mxu0 %v736
    %757 = vmatprep.subr.bf16.mxu0 0
    %758 = vmatpush1.bf16.msra.mxu0 %v737
    %759 = vmatprep.subr.bf16.mxu0 0
    %760 = vmatpush1.bf16.msra.mxu0 %v738
    %761 = vmatprep.subr.bf16.mxu0 0
    %762 = vmatpush1.bf16.msra.mxu0 %v739
    %763 = vmatprep.subr.bf16.mxu0 0
    %764 = vmatpush1.bf16.msra.mxu0 %v740
    %765 = vmatprep.subr.bf16.mxu0 0
    %766 = vmatpush1.bf16.msra.mxu0 0
    %767 = vmatprep.subr.bf16.mxu0 0
    %768 = vmatpush1.bf16.msra.mxu0 0
    %769 = vmatprep.subr.bf16.mxu0 0
    %770 = vmatpush1.bf16.msra.mxu0 0
    %771 = vmatprep.subr.bf16.mxu0 0
    %772 = vmatpush1.bf16.msra.mxu0 0
    %773 = vmatprep.subr.bf16.mxu0 0
    %774 = vmatpush1.bf16.msra.mxu0 0
    %775 = vmatprep.subr.bf16.mxu0 0
    %776 = vmatpush1.bf16.msra.mxu0 0
    %777 = vmatprep.subr.bf16.mxu0 0
    %778 = vmatpush1.bf16.msra.mxu0 0
    %779 = vmatprep.subr.bf16.mxu0 0
    %780 = vmatpush1.bf16.msra.mxu0 0
    %781 = vmatprep.mubr.bf16.mxu0 0
    %782 = vmatmul.mubr.bf16.gmra.mrb[0].mxu0 %v668
    %v783 = vpop.f32.mrb[0].mxu0
    %v784 = vadd.f32 %v699, %v783
    %v785 = vpop.f32.mrb[0].mxu0
    %v786 = vpop.f32.mrb[0].mxu0
    %v787 = vadd.f32 %v699, %v786
    %v788 = vpop.f32.mrb[0].mxu0
    %789 = vdwg.mxu0
    %v790 = vmax.f32 %v784, 0.0
    %v791 = vmax.f32 %v787, 0.0
    %v792 = vunpack.c.l.bf16 %v153
    %v793 = vunpack.c.l.bf16 %v154
    %v794 = vadd.f32 %v790, %v792
    %v795 = vadd.f32 %v791, %v793
    %v796 = vpack.c.bf16 %v795, %v794
    %v798 = vunpack.c.l.b16 %v796
    %v799 = vunpack.c.h.b16 %v796
    %v800 = vpack.c.b16 %v798, %v798
    %v801 = vpack.c.b16 %v799, %v799
    %804 = vst [vmem:[#allocation17] sm:$0xf] %v800
    %805 = vst [vmem:[#allocation17 + $0x4] sm:$0xf] %v801
    // Predicated region
    $region74: #{tpu_custom_call.1} parent=1 // pred_check
      _
    $region75: #{tpu_custom_call.1} parent=1 // pred_check_branch
      %807 = sbr.rel (0) target = $region77
    $region76: #{tpu_custom_call.1} parent=1 // pred_region
      %s809 = ssub.s32 128, 128
      %810 = vsyncadd [#allocation4], %s809
      %s811 = sshll.u32 [#allocation17], 4
      %s812 = int_to_ptr.vmem [resolvable:$true] %s811
      %817 = dma.vmem_to_hbm [thread:$0]  %s812, 128, %s9, [#allocation4], 64, 64, 4
    $region77: #{tpu_custom_call.1} parent=1 // pred_fallthru
      _
    // Predicated region
    $region78: #{tpu_custom_call.1} parent=1 // pred_check
      _
    $region79: #{tpu_custom_call.1} parent=1 // pred_check_branch
      %819 = sbr.rel (0) target = $region81
    $region80: #{tpu_custom_call.1} parent=1 // pred_region
      %s821 = ssub.s32 128, 128
      %822 = vsyncadd [#allocation19], %s821
      %s823 = sshll.u32 [#allocation18], 4
      %s824 = int_to_ptr.vmem [resolvable:$true] %s823
      %829 = dma.vmem_to_hbm [thread:$0]  %s824, 128, %s10, [#allocation19], 64, 64, 4
    $region81: #{tpu_custom_call.1} parent=1 // pred_fallthru
      _
    // Predicated region
    $region82: #{tpu_custom_call.1} parent=1 // pred_check
      _
    $region83: #{tpu_custom_call.1} parent=1 // pred_check_branch
      %831 = sbr.rel (0) target = $region85
    $region84: #{tpu_custom_call.1} parent=1 // pred_region
      %832 = dma.done [#allocation4], 128
    $region85: #{tpu_custom_call.1} parent=1 // pred_fallthru
      _
    // Predicated region
    $region86: #{tpu_custom_call.1} parent=1 // pred_check
      _
    $region87: #{tpu_custom_call.1} parent=1 // pred_check_branch
      %834 = sbr.rel (0) target = $region89
    $region88: #{tpu_custom_call.1} parent=1 // pred_region
      %835 = dma.done [#allocation19], 128
    $region89: #{tpu_custom_call.1} parent=1 // pred_fallthru
      _
    %836 = vsyncpa [#allocation3], 1
    %837 = vsyncpa [#allocation6], 1
    %838 = vsyncpa [#allocation9], 1
    %839 = vsyncpa [#allocation12], 1
    %840 = vsyncpa [#allocation15], 1
    %841 = vsyncpa [#allocation4], 1
    %842 = vsyncpa [#allocation19], 1

</llo_original>
